<compile_context>
chip_gen: v7x
topology: tpu7x:2x2x1
jax: 0.10.0
libtpu: 0.0.40
codegen_flags: <defaults>
</compile_context>

<pallas_src>
import jax
import jax.numpy as jnp
from jax.experimental import pallas as pl
from jax.experimental.pallas import tpu as pltpu

# Lane-dense candidate widths (multiples of 128); widest one that divides the
# flattened size exactly is used -> zero padding, zero extra HBM copies.
_COL_CANDIDATES = (1024, 512, 256, 128)

# Per-block byte budget (per array).  2 MiB blocks double-buffered for input
# and output -> ~8 MiB live: fits v5e's 16 MiB default scoped VMEM and leaves
# plenty of headroom on v6e/v7x (32 MiB default).
_MAX_TILE_BYTES = 2 * 1024 * 1024
# Keep blocks >= ~0.5 MiB so the ~0.35 us/grid-step overhead stays amortized.
_MIN_TILE_BYTES = 512 * 1024

# Below this many elements, wrapper reshape + kernel launch + per-step
# overhead exceed a fused XLA sigmoid.
_PALLAS_MIN_ELEMS = 128 * 1024

_TARGET_GRID_STEPS = 8  # enough steps for steady-state DMA/compute overlap


def _sigmoid_kernel(x_ref, o_ref):
    # bf16 tanh is native on the v6e/v7x EUP; other dtypes compute in f32.
    compute_dtype = jnp.bfloat16 if x_ref.dtype == jnp.bfloat16 else jnp.float32
    x = x_ref[...].astype(compute_dtype)
    # sigmoid(x) = 0.5 * tanh(0.5*x) + 0.5 : one EUP transcendental, no VPU
    # divide.  For a ragged last block the out-of-range lanes may hold stale
    # data (tanh could even give NaN there) — harmless: Pallas masks those
    # stores out.
    o_ref[...] = (0.5 * jnp.tanh(0.5 * x) + 0.5).astype(o_ref.dtype)


def _round_down_to(a: int, b: int) -> int:
    return (a // b) * b


def lhmd_forward(x: jax.Array, *, donate: bool = False) -> jax.Array:
    """Sigmoid over an arbitrary-shape tensor, computed in a Pallas TPU kernel.

    Semantics match the PyTorch LHMD module: forward(x) = Sigmoid(x).
    Set donate=True only when the caller donates x's buffer (enables
    input_output_aliases for an in-place-safe elementwise op).
    """
    total = x.size

    # Tiny inputs: kernel launch + reshapes are pure overhead.
    if total < _PALLAS_MIN_ELEMS:
        return jax.nn.sigmoid(x)

    # Widest lane-dense width that divides the element count exactly.
    cols = next((c for c in _COL_CANDIDATES if total % c == 0), None)
    if cols is None:
        # Not a multiple of 128: padding would cost an extra HBM read+write
        # on a purely bandwidth-bound op, so let XLA handle it.
        return jax.nn.sigmoid(x)

    rows = total // cols  # >= 128 given _PALLAS_MIN_ELEMS and cols <= 1024
    x2d = x.reshape(rows, cols)

    bytes_per_row = cols * x.dtype.itemsize
    max_tile_rows = max(8, _round_down_to(_MAX_TILE_BYTES // bytes_per_row, 8))
    min_tile_rows = max(8, _round_down_to(_MIN_TILE_BYTES // bytes_per_row, 8))

    # Aim for ~_TARGET_GRID_STEPS pipeline steps within the byte budget.
    tile_rows = _round_down_to(max(pl.cdiv(rows, _TARGET_GRID_STEPS), 8), 8)
    tile_rows = min(max_tile_rows, max(min_tile_rows, tile_rows))
    # Guarantee >= 2 grid steps so v7x's two TensorCores both get work.
    if pl.cdiv(rows, tile_rows) < 2:
        tile_rows = max(8, _round_down_to(pl.cdiv(rows, 2), 8))

    grid = (pl.cdiv(rows, tile_rows),)

    out2d = pl.pallas_call(
        _sigmoid_kernel,
        out_shape=jax.ShapeDtypeStruct((rows, cols), x.dtype),
        grid=grid,
        in_specs=[pl.BlockSpec((tile_rows, cols), lambda i: (i, 0))],
        out_specs=pl.BlockSpec((tile_rows, cols), lambda i: (i, 0)),
        compiler_params=pltpu.CompilerParams(
            # Independent tiles: lets v7x's two TensorCores split the grid.
            dimension_semantics=("parallel",),
        ),
        input_output_aliases={0: 0} if donate else {},
    )(x2d)

    return out2d.reshape(x.shape)


if __name__ == "__main__":
    key = jax.random.PRNGKey(0)
    k1, k2, k3, k4, k5 = jax.random.split(key, 5)

    # 1) The script's actual shipped shape (2,1,2,2): 8 elements -> XLA fast path.
    x_small = jax.random.normal(k1, (2, 1, 2, 2), dtype=jnp.float32)
    # 2) Small NCHW tensor (2,4,16,16): 2K elements -> still the XLA fast path.
    x_med = jax.random.normal(k2, (2, 4, 16, 16), dtype=jnp.float32)
    # 3) Larger tensor exercising the pipelined Pallas grid (rows=1024, grid=(8,)).
    x_big = jax.random.normal(k3, (4, 8, 64, 512), dtype=jnp.float32)
    # 4) Shape whose row count is not a multiple of the tile -> ragged last block.
    x_ragged = jax.random.normal(k4, (3, 5, 16, 1024), dtype=jnp.float32)
    # 5) bf16 input exercising the native-bf16 compute path.
    x_bf16 = jax.random.normal(k5, (2, 8, 64, 256), dtype=jnp.bfloat16)

    for x in (x_small, x_med, x_big, x_ragged, x_bf16):
        y = lhmd_forward(x)
        jax.block_until_ready(y)
        y_ref = jax.nn.sigmoid(x)
        assert y.shape == x.shape and y.dtype == x.dtype
        atol = 1e-2 if x.dtype == jnp.bfloat16 else 2e-6
        assert jnp.allclose(
            y.astype(jnp.float32), y_ref.astype(jnp.float32), atol=atol
        ), "mismatch vs reference sigmoid"

    print("KERNEL_OK")
</pallas_src>

<mosaic_0001>
module attributes {stable_mosaic.version = 11 : i64} {
  func.func @_sigmoid_kernel(%arg0: i32, %arg1: memref<128x1024xf32, #tpu.memory_space<vmem>>, %arg2: memref<128x1024xf32, #tpu.memory_space<vmem>>) attributes {dimension_semantics = [#tpu.dimension_semantics<parallel>], iteration_bounds = array<i64: 8>, scalar_prefetch = 0 : i64, scratch_operands = 0 : i64, tpu.core_type = #tpu.core_type<tc>, window_params = [{transform_indices = @transform_0, window_bounds = array<i64: 128, 1024>}, {transform_indices = @transform_1, window_bounds = array<i64: 128, 1024>}]} {
    %c0 = arith.constant 0 : index
    %c0_0 = arith.constant 0 : index
    %0 = vector.load %arg1[%c0, %c0_0] : memref<128x1024xf32, #tpu.memory_space<vmem>>, vector<128x1024xf32>
    %cst = arith.constant 5.000000e-01 : f32
    %1 = vector.broadcast %cst : f32 to vector<128x1024xf32>
    %2 = arith.mulf %1, %0 : vector<128x1024xf32>
    %3 = math.tanh %2 : vector<128x1024xf32>
    %cst_1 = arith.constant 5.000000e-01 : f32
    %4 = vector.broadcast %cst_1 : f32 to vector<128x1024xf32>
    %5 = arith.mulf %4, %3 : vector<128x1024xf32>
    %cst_2 = arith.constant 5.000000e-01 : f32
    %6 = vector.broadcast %cst_2 : f32 to vector<128x1024xf32>
    %7 = arith.addf %5, %6 : vector<128x1024xf32>
    %c0_3 = arith.constant 0 : index
    %c0_4 = arith.constant 0 : index
    %8 = vector.load %arg2[%c0_3, %c0_4] : memref<128x1024xf32, #tpu.memory_space<vmem>>, vector<128x1024xf32>
    tpu.vector_store %arg2[%c0_3, %c0_4], %7 {strides = array<i32>} : memref<128x1024xf32, #tpu.memory_space<vmem>>, vector<128x1024xf32>,
    return
  }
  func.func @transform_0(%arg0: i32) -> (i32, i32) {
    %c0_i32 = arith.constant 0 : i32
    %c0_i32_0 = arith.constant 0 : i32
    return %arg0, %c0_i32 : i32, i32
  }
  func.func @transform_1(%arg0: i32) -> (i32, i32) {
    %c0_i32 = arith.constant 0 : i32
    %c0_i32_0 = arith.constant 0 : i32
    return %arg0, %c0_i32 : i32, i32
  }
}

</mosaic_0001>

<llo_original>
// kernel: tpu_custom_call.1
$region0: #{tpu_custom_call.1}
  #allocation0 [shape = 'u32[]', space=smem, size = 0x4, offset = 0x4, fixed_abs, tag = 'smem constant byte address 0x4 - core index']
  #allocation1 [shape = 'u32[144,128]{1,0:T(1,128)}', space=vmem, size = 0x12000, scoped, tag = 'internal scratch']
  %s0 = inlined_call_operand.hbm [shape: f32[1024,1024], index: 0, kind: input, shape index: {}]
  %s1 = inlined_call_operand.hbm [shape: f32[1024,1024], index: 1, kind: output, shape index: {}]
  %s2 = sld [smem:[#allocation0]]
  $region41: #{tpu_custom_call.1} parent=0
    _
  %s4 = ssub.s32 1, %s2
  %s5 = scalar_select 0, %s4, %s2
  $region1: #{tpu_custom_call.1} parent=0
    #allocation2 [shape = 'u8[1048576]{0}', space=vmem, size = 0x100000, scoped, tag = 'input window, operand 0']
    #allocation3 [shape = 's32[2]{0}', space=sflag, size = 0x8, scoped, tag = 'scoped memory for tpu_custom_call.1']
    #allocation4 [shape = 's32[2]{0}', space=sflag, size = 0x8, scoped, tag = 'scoped memory for tpu_custom_call.1']
    #allocation5 [shape = 'u8[1048576]{0}', space=vmem, size = 0x100000, scoped, tag = 'output window, operand 0']
    %6 = vsyncpa [#allocation3], 0
    %s7 = scalar_lea.sflag [#allocation3], 1
    %8 = vsyncpa %s7, 0
    %9 = vsyncpa [#allocation4], 0
    %s10 = scalar_lea.sflag [#allocation4], 1
    %11 = vsyncpa %s10, 0
    loop: start=0, step=1, limit=10
    $region2: #{tpu_custom_call.1} parent=1 // loop_pre_header
      _
    $region3: #{tpu_custom_call.1} parent=1 // loop_header
      %s13 = sphi 0, %s17
      %p14 = scmp.ge.s32.totalorder %s13, 10
      %s23 = sphi 0, %s25
      %s26 = sphi 0, %s23
      %s27 = sphi 0, %s26
      %s43 = sphi 0, %s27
      %s49 = sphi 0, %s51
      %s52 = sphi 0, %s49
      %s53 = sphi 0, %s52
      %s69 = sphi 0, %s53
    $region4: #{tpu_custom_call.1} parent=1 // loop_header_branch
      %16 = sbr.rel (%p14) target = $region8
    $region5: #{tpu_custom_call.1} parent=1 // loop_body
      %s18 = ssub.s32 %s13, 1
      %s19 = ssub.s32 %s13, 2
      %s20 = sadd.s32 %s13, 1
      %s21 = ssub.s32 %s13, %s20
      %p22 = scmp.eq.s32.totalorder %s21, 0
      %s24 = sadd.s32 %s23, 1
      %s25 = scalar_select %p22, %s23, %s24
      %p28 = pneg %p22
      %p29 = scmp.eq.s32.totalorder %s13, 7
      %p30 = por %p28, %p29
      %p31 = scmp.ne.s32.totalorder %s23, %s26
      %p32 = scmp.eq.s32.totalorder %s13, 0
      %p33 = por %p31, %p32
      %p34 = scmp.ne.s32.totalorder %s23, %s26
      %p35 = scmp.eq.s32.totalorder %s18, 7
      %p36 = por %p34, %p35
      %p37 = scmp.ne.s32.totalorder %s26, %s27
      %p38 = scmp.eq.s32.totalorder %s18, 0
      %p39 = por %p37, %p38
      %p40 = scmp.ne.s32.totalorder %s26, %s27
      %p41 = scmp.eq.s32.totalorder %s19, 7
      %p42 = por %p40, %p41
      %p44 = scmp.ne.s32.totalorder %s27, %s43
      %p45 = scmp.eq.s32.totalorder %s19, 0
      %p46 = por %p44, %p45
      %s47 = ssub.s32 %s13, %s20
      %p48 = scmp.eq.s32.totalorder %s47, 0
      %s50 = sadd.s32 %s49, 1
      %s51 = scalar_select %p48, %s49, %s50
      %p54 = pneg %p48
      %p55 = scmp.eq.s32.totalorder %s13, 7
      %p56 = por %p54, %p55
      %p57 = scmp.ne.s32.totalorder %s49, %s52
      %p58 = scmp.eq.s32.totalorder %s13, 0
      %p59 = por %p57, %p58
      %p60 = scmp.ne.s32.totalorder %s49, %s52
      %p61 = scmp.eq.s32.totalorder %s18, 7
      %p62 = por %p60, %p61
      %p63 = scmp.ne.s32.totalorder %s52, %s53
      %p64 = scmp.eq.s32.totalorder %s18, 0
      %p65 = por %p63, %p64
      %p66 = scmp.ne.s32.totalorder %s52, %s53
      %p67 = scmp.eq.s32.totalorder %s19, 7
      %p68 = por %p66, %p67
      %p70 = scmp.ne.s32.totalorder %s53, %s69
      %p71 = scmp.eq.s32.totalorder %s19, 0
      %p72 = por %p70, %p71
      %p73 = scmp.le.s32.totalorder 1, %s13
      %p74 = scmp.lt.s32.totalorder %s13, 9
      %p75 = pnand %p73, %p74
      %p76 = pneg %p75
      // Predicated region
      $region9: #{tpu_custom_call.1} parent=5 // pred_check
        _
      $region10: #{tpu_custom_call.1} parent=5 // pred_check_branch
        %78 = sbr.rel (%p75) target = $region12
      $region11: #{tpu_custom_call.1} parent=5 // pred_region
        %s79 = ssub.s32 %s13, 1
      $region12: #{tpu_custom_call.1} parent=5 // pred_fallthru
        _
      %p80 = scmp.lt.s32.totalorder %s13, 8
      // Predicated region
      $region13: #{tpu_custom_call.1} parent=5 // pred_check
        %p81 = pneg %p80
      $region14: #{tpu_custom_call.1} parent=5 // pred_check_branch
        %83 = sbr.rel (%p81) target = $region16
      $region15: #{tpu_custom_call.1} parent=5 // pred_region
        // Predicated region
        $region17: #{tpu_custom_call.1} parent=15 // pred_check
          %p84 = pneg %p33
        $region18: #{tpu_custom_call.1} parent=15 // pred_check_branch
          %86 = sbr.rel (%p84) target = $region20
        $region19: #{tpu_custom_call.1} parent=15 // pred_region
          %s87 = sand.u32 %s23, 1
          %s88 = scalar_lea.sflag [#allocation3], %s87
          %s89 = sand.u32 %s23, 1
          %s90 = smul.addr %s89, 1024
          %s91 = scalar_lea.vmem [#allocation2], %s90
          %s92 = smul.u32 16, %s13
          %s94 = ssub.s32 16384, 16384
          %95 = vsyncadd %s88, %s94
          %s96 = smul.addr %s92, 8
          %s97 = smul.addr %s96, 128
          %s98 = scalar_lea.hbm %s0, %s97
          %s99 = sshll.u32 %s91, 4
          %s100 = int_to_ptr.vmem [resolvable:$true] %s99
          %105 = dma.hbm_to_vmem [thread:$0]  %s98, 16384, %s100, %s88, 1024, 1024, 64
        $region20: #{tpu_custom_call.1} parent=15 // pred_fallthru
          _
      $region16: #{tpu_custom_call.1} parent=5 // pred_fallthru
        _
      %p106 = scmp.le.s32.totalorder 1, %s13
      %p107 = scmp.lt.s32.totalorder %s13, 9
      %p108 = pnand %p106, %p107
      %p109 = pneg %p108
      // Predicated region
      $region21: #{tpu_custom_call.1} parent=5 // pred_check
        _
      $region22: #{tpu_custom_call.1} parent=5 // pred_check_branch
        %111 = sbr.rel (%p108) target = $region24
      $region23: #{tpu_custom_call.1} parent=5 // pred_region
        %s112 = ssub.s32 %s13, 1
        %s113 = sand.u32 %s26, 1
        %s114 = scalar_lea.sflag [#allocation3], %s113
        %s115 = sand.u32 %s26, 1
        %s116 = smul.addr %s115, 1024
        %s117 = scalar_lea.vmem [#allocation2], %s116
        // Predicated region
        $region25: #{tpu_custom_call.1} parent=23 // pred_check
          %p118 = pneg %p39
        $region26: #{tpu_custom_call.1} parent=23 // pred_check_branch
          %120 = sbr.rel (%p118) target = $region28
        $region27: #{tpu_custom_call.1} parent=23 // pred_region
          %121 = dma.done %s114, 16384
        $region28: #{tpu_custom_call.1} parent=23 // pred_fallthru
          _
        %s122 = sand.u32 %s26, 1
        %s123 = scalar_lea.sflag [#allocation3], %s122
        %s124 = sand.u32 %s26, 1
        %s125 = smul.addr %s124, 1024
        %s126 = scalar_lea.vmem [#allocation2], %s125
        %p127 = pneg %p39
        %p128 = pneg %p36
        %p129 = pneg %p65
        %p130 = pneg %p62
        %s131 = sand.u32 %s52, 1
        %s132 = scalar_lea.sflag [#allocation4], %s131
        %s133 = sand.u32 %s52, 1
        %s134 = smul.addr %s133, 1024
        %s135 = scalar_lea.vmem [#allocation5], %s134
        %s136 = smul.u32 16, %s18
        %s137 = smul.u32 16, %s18
        %v138 = vld [vmem:[%s117] sm:$0xff]
        %v139 = vld [vmem:[%s117 + $0x8] sm:$0xff]
        %v140 = vld [vmem:[%s117 + $0x10] sm:$0xff]
        %v141 = vld [vmem:[%s117 + $0x18] sm:$0xff]
        %v142 = vld [vmem:[%s117 + $0x20] sm:$0xff]
        %v143 = vld [vmem:[%s117 + $0x28] sm:$0xff]
        %v144 = vld [vmem:[%s117 + $0x30] sm:$0xff]
        %v145 = vld [vmem:[%s117 + $0x38] sm:$0xff]
        %v146 = vld [vmem:[%s117 + $0x40] sm:$0xff]
        %v147 = vld [vmem:[%s117 + $0x48] sm:$0xff]
        %v148 = vld [vmem:[%s117 + $0x50] sm:$0xff]
        %v149 = vld [vmem:[%s117 + $0x58] sm:$0xff]
        %v150 = vld [vmem:[%s117 + $0x60] sm:$0xff]
        %v151 = vld [vmem:[%s117 + $0x68] sm:$0xff]
        %v152 = vld [vmem:[%s117 + $0x70] sm:$0xff]
        %v153 = vld [vmem:[%s117 + $0x78] sm:$0xff]
        %v154 = vld [vmem:[%s117 + $0x80] sm:$0xff]
        %v155 = vld [vmem:[%s117 + $0x88] sm:$0xff]
        %v156 = vld [vmem:[%s117 + $0x90] sm:$0xff]
        %v157 = vld [vmem:[%s117 + $0x98] sm:$0xff]
        %v158 = vld [vmem:[%s117 + $0xa0] sm:$0xff]
        %v159 = vld [vmem:[%s117 + $0xa8] sm:$0xff]
        %v160 = vld [vmem:[%s117 + $0xb0] sm:$0xff]
        %v161 = vld [vmem:[%s117 + $0xb8] sm:$0xff]
        %v162 = vld [vmem:[%s117 + $0xc0] sm:$0xff]
        %v163 = vld [vmem:[%s117 + $0xc8] sm:$0xff]
        %v164 = vld [vmem:[%s117 + $0xd0] sm:$0xff]
        %v165 = vld [vmem:[%s117 + $0xd8] sm:$0xff]
        %v166 = vld [vmem:[%s117 + $0xe0] sm:$0xff]
        %v167 = vld [vmem:[%s117 + $0xe8] sm:$0xff]
        %v168 = vld [vmem:[%s117 + $0xf0] sm:$0xff]
        %v169 = vld [vmem:[%s117 + $0xf8] sm:$0xff]
        %v170 = vld [vmem:[%s117 + $0x100] sm:$0xff]
        %v171 = vld [vmem:[%s117 + $0x108] sm:$0xff]
        %v172 = vld [vmem:[%s117 + $0x110] sm:$0xff]
        %v173 = vld [vmem:[%s117 + $0x118] sm:$0xff]
        %v174 = vld [vmem:[%s117 + $0x120] sm:$0xff]
        %v175 = vld [vmem:[%s117 + $0x128] sm:$0xff]
        %v176 = vld [vmem:[%s117 + $0x130] sm:$0xff]
        %v177 = vld [vmem:[%s117 + $0x138] sm:$0xff]
        %v178 = vld [vmem:[%s117 + $0x140] sm:$0xff]
        %v179 = vld [vmem:[%s117 + $0x148] sm:$0xff]
        %v180 = vld [vmem:[%s117 + $0x150] sm:$0xff]
        %v181 = vld [vmem:[%s117 + $0x158] sm:$0xff]
        %v182 = vld [vmem:[%s117 + $0x160] sm:$0xff]
        %v183 = vld [vmem:[%s117 + $0x168] sm:$0xff]
        %v184 = vld [vmem:[%s117 + $0x170] sm:$0xff]
        %v185 = vld [vmem:[%s117 + $0x178] sm:$0xff]
        %v186 = vld [vmem:[%s117 + $0x180] sm:$0xff]
        %v187 = vld [vmem:[%s117 + $0x188] sm:$0xff]
        %v188 = vld [vmem:[%s117 + $0x190] sm:$0xff]
        %v189 = vld [vmem:[%s117 + $0x198] sm:$0xff]
        %v190 = vld [vmem:[%s117 + $0x1a0] sm:$0xff]
        %v191 = vld [vmem:[%s117 + $0x1a8] sm:$0xff]
        %v192 = vld [vmem:[%s117 + $0x1b0] sm:$0xff]
        %v193 = vld [vmem:[%s117 + $0x1b8] sm:$0xff]
        %v194 = vld [vmem:[%s117 + $0x1c0] sm:$0xff]
        %v195 = vld [vmem:[%s117 + $0x1c8] sm:$0xff]
        %v196 = vld [vmem:[%s117 + $0x1d0] sm:$0xff]
        %v197 = vld [vmem:[%s117 + $0x1d8] sm:$0xff]
        %v198 = vld [vmem:[%s117 + $0x1e0] sm:$0xff]
        %v199 = vld [vmem:[%s117 + $0x1e8] sm:$0xff]
        %v200 = vld [vmem:[%s117 + $0x1f0] sm:$0xff]
        %v201 = vld [vmem:[%s117 + $0x1f8] sm:$0xff]
        %v202 = vld [vmem:[%s117 + $0x200] sm:$0xff]
        %v203 = vld [vmem:[%s117 + $0x208] sm:$0xff]
        %v204 = vld [vmem:[%s117 + $0x210] sm:$0xff]
        %v205 = vld [vmem:[%s117 + $0x218] sm:$0xff]
        %v206 = vld [vmem:[%s117 + $0x220] sm:$0xff]
        %v207 = vld [vmem:[%s117 + $0x228] sm:$0xff]
        %v208 = vld [vmem:[%s117 + $0x230] sm:$0xff]
        %v209 = vld [vmem:[%s117 + $0x238] sm:$0xff]
        %v210 = vld [vmem:[%s117 + $0x240] sm:$0xff]
        %v211 = vld [vmem:[%s117 + $0x248] sm:$0xff]
        %v212 = vld [vmem:[%s117 + $0x250] sm:$0xff]
        %v213 = vld [vmem:[%s117 + $0x258] sm:$0xff]
        %v214 = vld [vmem:[%s117 + $0x260] sm:$0xff]
        %v215 = vld [vmem:[%s117 + $0x268] sm:$0xff]
        %v216 = vld [vmem:[%s117 + $0x270] sm:$0xff]
        %v217 = vld [vmem:[%s117 + $0x278] sm:$0xff]
        %v218 = vld [vmem:[%s117 + $0x280] sm:$0xff]
        %v219 = vld [vmem:[%s117 + $0x288] sm:$0xff]
        %v220 = vld [vmem:[%s117 + $0x290] sm:$0xff]
        %v221 = vld [vmem:[%s117 + $0x298] sm:$0xff]
        %v222 = vld [vmem:[%s117 + $0x2a0] sm:$0xff]
        %v223 = vld [vmem:[%s117 + $0x2a8] sm:$0xff]
        %v224 = vld [vmem:[%s117 + $0x2b0] sm:$0xff]
        %v225 = vld [vmem:[%s117 + $0x2b8] sm:$0xff]
        %v226 = vld [vmem:[%s117 + $0x2c0] sm:$0xff]
        %v227 = vld [vmem:[%s117 + $0x2c8] sm:$0xff]
        %v228 = vld [vmem:[%s117 + $0x2d0] sm:$0xff]
        %v229 = vld [vmem:[%s117 + $0x2d8] sm:$0xff]
        %v230 = vld [vmem:[%s117 + $0x2e0] sm:$0xff]
        %v231 = vld [vmem:[%s117 + $0x2e8] sm:$0xff]
        %v232 = vld [vmem:[%s117 + $0x2f0] sm:$0xff]
        %v233 = vld [vmem:[%s117 + $0x2f8] sm:$0xff]
        %v234 = vld [vmem:[%s117 + $0x300] sm:$0xff]
        %v235 = vld [vmem:[%s117 + $0x308] sm:$0xff]
        %v236 = vld [vmem:[%s117 + $0x310] sm:$0xff]
        %v237 = vld [vmem:[%s117 + $0x318] sm:$0xff]
        %v238 = vld [vmem:[%s117 + $0x320] sm:$0xff]
        %v239 = vld [vmem:[%s117 + $0x328] sm:$0xff]
        %v240 = vld [vmem:[%s117 + $0x330] sm:$0xff]
        %v241 = vld [vmem:[%s117 + $0x338] sm:$0xff]
        %v242 = vld [vmem:[%s117 + $0x340] sm:$0xff]
        %v243 = vld [vmem:[%s117 + $0x348] sm:$0xff]
        %v244 = vld [vmem:[%s117 + $0x350] sm:$0xff]
        %v245 = vld [vmem:[%s117 + $0x358] sm:$0xff]
        %v246 = vld [vmem:[%s117 + $0x360] sm:$0xff]
        %v247 = vld [vmem:[%s117 + $0x368] sm:$0xff]
        %v248 = vld [vmem:[%s117 + $0x370] sm:$0xff]
        %v249 = vld [vmem:[%s117 + $0x378] sm:$0xff]
        %v250 = vld [vmem:[%s117 + $0x380] sm:$0xff]
        %v251 = vld [vmem:[%s117 + $0x388] sm:$0xff]
        %v252 = vld [vmem:[%s117 + $0x390] sm:$0xff]
        %v253 = vld [vmem:[%s117 + $0x398] sm:$0xff]
        %v254 = vld [vmem:[%s117 + $0x3a0] sm:$0xff]
        %v255 = vld [vmem:[%s117 + $0x3a8] sm:$0xff]
        %v256 = vld [vmem:[%s117 + $0x3b0] sm:$0xff]
        %v257 = vld [vmem:[%s117 + $0x3b8] sm:$0xff]
        %v258 = vld [vmem:[%s117 + $0x3c0] sm:$0xff]
        %v259 = vld [vmem:[%s117 + $0x3c8] sm:$0xff]
        %v260 = vld [vmem:[%s117 + $0x3d0] sm:$0xff]
        %v261 = vld [vmem:[%s117 + $0x3d8] sm:$0xff]
        %v262 = vld [vmem:[%s117 + $0x3e0] sm:$0xff]
        %v263 = vld [vmem:[%s117 + $0x3e8] sm:$0xff]
        %v264 = vld [vmem:[%s117 + $0x3f0] sm:$0xff]
        %v265 = vld [vmem:[%s117 + $0x3f8] sm:$0xff]
        %v266 = vmul.f32 %v138, 0.5
        %v267 = vmul.f32 %v139, 0.5
        %v268 = vmul.f32 %v140, 0.5
        %v269 = vmul.f32 %v141, 0.5
        %v270 = vmul.f32 %v142, 0.5
        %v271 = vmul.f32 %v143, 0.5
        %v272 = vmul.f32 %v144, 0.5
        %v273 = vmul.f32 %v145, 0.5
        %v274 = vmul.f32 %v146, 0.5
        %v275 = vmul.f32 %v147, 0.5
        %v276 = vmul.f32 %v148, 0.5
        %v277 = vmul.f32 %v149, 0.5
        %v278 = vmul.f32 %v150, 0.5
        %v279 = vmul.f32 %v151, 0.5
        %v280 = vmul.f32 %v152, 0.5
        %v281 = vmul.f32 %v153, 0.5
        %v282 = vmul.f32 %v154, 0.5
        %v283 = vmul.f32 %v155, 0.5
        %v284 = vmul.f32 %v156, 0.5
        %v285 = vmul.f32 %v157, 0.5
        %v286 = vmul.f32 %v158, 0.5
        %v287 = vmul.f32 %v159, 0.5
        %v288 = vmul.f32 %v160, 0.5
        %v289 = vmul.f32 %v161, 0.5
        %v290 = vmul.f32 %v162, 0.5
        %v291 = vmul.f32 %v163, 0.5
        %v292 = vmul.f32 %v164, 0.5
        %v293 = vmul.f32 %v165, 0.5
        %v294 = vmul.f32 %v166, 0.5
        %v295 = vmul.f32 %v167, 0.5
        %v296 = vmul.f32 %v168, 0.5
        %v297 = vmul.f32 %v169, 0.5
        %v298 = vmul.f32 %v170, 0.5
        %v299 = vmul.f32 %v171, 0.5
        %v300 = vmul.f32 %v172, 0.5
        %v301 = vmul.f32 %v173, 0.5
        %v302 = vmul.f32 %v174, 0.5
        %v303 = vmul.f32 %v175, 0.5
        %v304 = vmul.f32 %v176, 0.5
        %v305 = vmul.f32 %v177, 0.5
        %v306 = vmul.f32 %v178, 0.5
        %v307 = vmul.f32 %v179, 0.5
        %v308 = vmul.f32 %v180, 0.5
        %v309 = vmul.f32 %v181, 0.5
        %v310 = vmul.f32 %v182, 0.5
        %v311 = vmul.f32 %v183, 0.5
        %v312 = vmul.f32 %v184, 0.5
        %v313 = vmul.f32 %v185, 0.5
        %v314 = vmul.f32 %v186, 0.5
        %v315 = vmul.f32 %v187, 0.5
        %v316 = vmul.f32 %v188, 0.5
        %v317 = vmul.f32 %v189, 0.5
        %v318 = vmul.f32 %v190, 0.5
        %v319 = vmul.f32 %v191, 0.5
        %v320 = vmul.f32 %v192, 0.5
        %v321 = vmul.f32 %v193, 0.5
        %v322 = vmul.f32 %v194, 0.5
        %v323 = vmul.f32 %v195, 0.5
        %v324 = vmul.f32 %v196, 0.5
        %v325 = vmul.f32 %v197, 0.5
        %v326 = vmul.f32 %v198, 0.5
        %v327 = vmul.f32 %v199, 0.5
        %v328 = vmul.f32 %v200, 0.5
        %v329 = vmul.f32 %v201, 0.5
        %v330 = vmul.f32 %v202, 0.5
        %v331 = vmul.f32 %v203, 0.5
        %v332 = vmul.f32 %v204, 0.5
        %v333 = vmul.f32 %v205, 0.5
        %v334 = vmul.f32 %v206, 0.5
        %v335 = vmul.f32 %v207, 0.5
        %v336 = vmul.f32 %v208, 0.5
        %v337 = vmul.f32 %v209, 0.5
        %v338 = vmul.f32 %v210, 0.5
        %v339 = vmul.f32 %v211, 0.5
        %v340 = vmul.f32 %v212, 0.5
        %v341 = vmul.f32 %v213, 0.5
        %v342 = vmul.f32 %v214, 0.5
        %v343 = vmul.f32 %v215, 0.5
        %v344 = vmul.f32 %v216, 0.5
        %v345 = vmul.f32 %v217, 0.5
        %v346 = vmul.f32 %v218, 0.5
        %v347 = vmul.f32 %v219, 0.5
        %v348 = vmul.f32 %v220, 0.5
        %v349 = vmul.f32 %v221, 0.5
        %v350 = vmul.f32 %v222, 0.5
        %v351 = vmul.f32 %v223, 0.5
        %v352 = vmul.f32 %v224, 0.5
        %v353 = vmul.f32 %v225, 0.5
        %v354 = vmul.f32 %v226, 0.5
        %v355 = vmul.f32 %v227, 0.5
        %v356 = vmul.f32 %v228, 0.5
        %v357 = vmul.f32 %v229, 0.5
        %v358 = vmul.f32 %v230, 0.5
        %v359 = vmul.f32 %v231, 0.5
        %v360 = vmul.f32 %v232, 0.5
        %v361 = vmul.f32 %v233, 0.5
        %v362 = vmul.f32 %v234, 0.5
        %v363 = vmul.f32 %v235, 0.5
        %v364 = vmul.f32 %v236, 0.5
        %v365 = vmul.f32 %v237, 0.5
        %v366 = vmul.f32 %v238, 0.5
        %v367 = vmul.f32 %v239, 0.5
        %v368 = vmul.f32 %v240, 0.5
        %v369 = vmul.f32 %v241, 0.5
        %v370 = vmul.f32 %v242, 0.5
        %v371 = vmul.f32 %v243, 0.5
        %v372 = vmul.f32 %v244, 0.5
        %v373 = vmul.f32 %v245, 0.5
        %v374 = vmul.f32 %v246, 0.5
        %v375 = vmul.f32 %v247, 0.5
        %v376 = vmul.f32 %v248, 0.5
        %v377 = vmul.f32 %v249, 0.5
        %v378 = vmul.f32 %v250, 0.5
        %v379 = vmul.f32 %v251, 0.5
        %v380 = vmul.f32 %v252, 0.5
        %v381 = vmul.f32 %v253, 0.5
        %v382 = vmul.f32 %v254, 0.5
        %v383 = vmul.f32 %v255, 0.5
        %v384 = vmul.f32 %v256, 0.5
        %v385 = vmul.f32 %v257, 0.5
        %v386 = vmul.f32 %v258, 0.5
        %v387 = vmul.f32 %v259, 0.5
        %v388 = vmul.f32 %v260, 0.5
        %v389 = vmul.f32 %v261, 0.5
        %v390 = vmul.f32 %v262, 0.5
        %v391 = vmul.f32 %v263, 0.5
        %v392 = vmul.f32 %v264, 0.5
        %v393 = vmul.f32 %v265, 0.5
        %v394 = vtanh.pop %v266
        %v395 = vtanh.pop %v267
        %v396 = vtanh.pop %v268
        %v397 = vtanh.pop %v269
        %v398 = vtanh.pop %v270
        %v399 = vtanh.pop %v271
        %v400 = vtanh.pop %v272
        %v401 = vtanh.pop %v273
        %v402 = vtanh.pop %v274
        %v403 = vtanh.pop %v275
        %v404 = vtanh.pop %v276
        %v405 = vtanh.pop %v277
        %v406 = vtanh.pop %v278
        %v407 = vtanh.pop %v279
        %v408 = vtanh.pop %v280
        %v409 = vtanh.pop %v281
        %v410 = vtanh.pop %v282
        %v411 = vtanh.pop %v283
        %v412 = vtanh.pop %v284
        %v413 = vtanh.pop %v285
        %v414 = vtanh.pop %v286
        %v415 = vtanh.pop %v287
        %v416 = vtanh.pop %v288
        %v417 = vtanh.pop %v289
        %v418 = vtanh.pop %v290
        %v419 = vtanh.pop %v291
        %v420 = vtanh.pop %v292
        %v421 = vtanh.pop %v293
        %v422 = vtanh.pop %v294
        %v423 = vtanh.pop %v295
        %v424 = vtanh.pop %v296
        %v425 = vtanh.pop %v297
        %v426 = vtanh.pop %v298
        %v427 = vtanh.pop %v299
        %v428 = vtanh.pop %v300
        %v429 = vtanh.pop %v301
        %v430 = vtanh.pop %v302
        %v431 = vtanh.pop %v303
        %v432 = vtanh.pop %v304
        %v433 = vtanh.pop %v305
        %v434 = vtanh.pop %v306
        %v435 = vtanh.pop %v307
        %v436 = vtanh.pop %v308
        %v437 = vtanh.pop %v309
        %v438 = vtanh.pop %v310
        %v439 = vtanh.pop %v311
        %v440 = vtanh.pop %v312
        %v441 = vtanh.pop %v313
        %v442 = vtanh.pop %v314
        %v443 = vtanh.pop %v315
        %v444 = vtanh.pop %v316
        %v445 = vtanh.pop %v317
        %v446 = vtanh.pop %v318
        %v447 = vtanh.pop %v319
        %v448 = vtanh.pop %v320
        %v449 = vtanh.pop %v321
        %v450 = vtanh.pop %v322
        %v451 = vtanh.pop %v323
        %v452 = vtanh.pop %v324
        %v453 = vtanh.pop %v325
        %v454 = vtanh.pop %v326
        %v455 = vtanh.pop %v327
        %v456 = vtanh.pop %v328
        %v457 = vtanh.pop %v329
        %v458 = vtanh.pop %v330
        %v459 = vtanh.pop %v331
        %v460 = vtanh.pop %v332
        %v461 = vtanh.pop %v333
        %v462 = vtanh.pop %v334
        %v463 = vtanh.pop %v335
        %v464 = vtanh.pop %v336
        %v465 = vtanh.pop %v337
        %v466 = vtanh.pop %v338
        %v467 = vtanh.pop %v339
        %v468 = vtanh.pop %v340
        %v469 = vtanh.pop %v341
        %v470 = vtanh.pop %v342
        %v471 = vtanh.pop %v343
        %v472 = vtanh.pop %v344
        %v473 = vtanh.pop %v345
        %v474 = vtanh.pop %v346
        %v475 = vtanh.pop %v347
        %v476 = vtanh.pop %v348
        %v477 = vtanh.pop %v349
        %v478 = vtanh.pop %v350
        %v479 = vtanh.pop %v351
        %v480 = vtanh.pop %v352
        %v481 = vtanh.pop %v353
        %v482 = vtanh.pop %v354
        %v483 = vtanh.pop %v355
        %v484 = vtanh.pop %v356
        %v485 = vtanh.pop %v357
        %v486 = vtanh.pop %v358
        %v487 = vtanh.pop %v359
        %v488 = vtanh.pop %v360
        %v489 = vtanh.pop %v361
        %v490 = vtanh.pop %v362
        %v491 = vtanh.pop %v363
        %v492 = vtanh.pop %v364
        %v493 = vtanh.pop %v365
        %v494 = vtanh.pop %v366
        %v495 = vtanh.pop %v367
        %v496 = vtanh.pop %v368
        %v497 = vtanh.pop %v369
        %v498 = vtanh.pop %v370
        %v499 = vtanh.pop %v371
        %v500 = vtanh.pop %v372
        %v501 = vtanh.pop %v373
        %v502 = vtanh.pop %v374
        %v503 = vtanh.pop %v375
        %v504 = vtanh.pop %v376
        %v505 = vtanh.pop %v377
        %v506 = vtanh.pop %v378
        %v507 = vtanh.pop %v379
        %v508 = vtanh.pop %v380
        %v509 = vtanh.pop %v381
        %v510 = vtanh.pop %v382
        %v511 = vtanh.pop %v383
        %v512 = vtanh.pop %v384
        %v513 = vtanh.pop %v385
        %v514 = vtanh.pop %v386
        %v515 = vtanh.pop %v387
        %v516 = vtanh.pop %v388
        %v517 = vtanh.pop %v389
        %v518 = vtanh.pop %v390
        %v519 = vtanh.pop %v391
        %v520 = vtanh.pop %v392
        %v521 = vtanh.pop %v393
        %v522 = vmul.f32 %v394, 0.5
        %v523 = vmul.f32 %v395, 0.5
        %v524 = vmul.f32 %v396, 0.5
        %v525 = vmul.f32 %v397, 0.5
        %v526 = vmul.f32 %v398, 0.5
        %v527 = vmul.f32 %v399, 0.5
        %v528 = vmul.f32 %v400, 0.5
        %v529 = vmul.f32 %v401, 0.5
        %v530 = vmul.f32 %v402, 0.5
        %v531 = vmul.f32 %v403, 0.5
        %v532 = vmul.f32 %v404, 0.5
        %v533 = vmul.f32 %v405, 0.5
        %v534 = vmul.f32 %v406, 0.5
        %v535 = vmul.f32 %v407, 0.5
        %v536 = vmul.f32 %v408, 0.5
        %v537 = vmul.f32 %v409, 0.5
        %v538 = vmul.f32 %v410, 0.5
        %v539 = vmul.f32 %v411, 0.5
        %v540 = vmul.f32 %v412, 0.5
        %v541 = vmul.f32 %v413, 0.5
        %v542 = vmul.f32 %v414, 0.5
        %v543 = vmul.f32 %v415, 0.5
        %v544 = vmul.f32 %v416, 0.5
        %v545 = vmul.f32 %v417, 0.5
        %v546 = vmul.f32 %v418, 0.5
        %v547 = vmul.f32 %v419, 0.5
        %v548 = vmul.f32 %v420, 0.5
        %v549 = vmul.f32 %v421, 0.5
        %v550 = vmul.f32 %v422, 0.5
        %v551 = vmul.f32 %v423, 0.5
        %v552 = vmul.f32 %v424, 0.5
        %v553 = vmul.f32 %v425, 0.5
        %v554 = vmul.f32 %v426, 0.5
        %v555 = vmul.f32 %v427, 0.5
        %v556 = vmul.f32 %v428, 0.5
        %v557 = vmul.f32 %v429, 0.5
        %v558 = vmul.f32 %v430, 0.5
        %v559 = vmul.f32 %v431, 0.5
        %v560 = vmul.f32 %v432, 0.5
        %v561 = vmul.f32 %v433, 0.5
        %v562 = vmul.f32 %v434, 0.5
        %v563 = vmul.f32 %v435, 0.5
        %v564 = vmul.f32 %v436, 0.5
        %v565 = vmul.f32 %v437, 0.5
        %v566 = vmul.f32 %v438, 0.5
        %v567 = vmul.f32 %v439, 0.5
        %v568 = vmul.f32 %v440, 0.5
        %v569 = vmul.f32 %v441, 0.5
        %v570 = vmul.f32 %v442, 0.5
        %v571 = vmul.f32 %v443, 0.5
        %v572 = vmul.f32 %v444, 0.5
        %v573 = vmul.f32 %v445, 0.5
        %v574 = vmul.f32 %v446, 0.5
        %v575 = vmul.f32 %v447, 0.5
        %v576 = vmul.f32 %v448, 0.5
        %v577 = vmul.f32 %v449, 0.5
        %v578 = vmul.f32 %v450, 0.5
        %v579 = vmul.f32 %v451, 0.5
        %v580 = vmul.f32 %v452, 0.5
        %v581 = vmul.f32 %v453, 0.5
        %v582 = vmul.f32 %v454, 0.5
        %v583 = vmul.f32 %v455, 0.5
        %v584 = vmul.f32 %v456, 0.5
        %v585 = vmul.f32 %v457, 0.5
        %v586 = vmul.f32 %v458, 0.5
        %v587 = vmul.f32 %v459, 0.5
        %v588 = vmul.f32 %v460, 0.5
        %v589 = vmul.f32 %v461, 0.5
        %v590 = vmul.f32 %v462, 0.5
        %v591 = vmul.f32 %v463, 0.5
        %v592 = vmul.f32 %v464, 0.5
        %v593 = vmul.f32 %v465, 0.5
        %v594 = vmul.f32 %v466, 0.5
        %v595 = vmul.f32 %v467, 0.5
        %v596 = vmul.f32 %v468, 0.5
        %v597 = vmul.f32 %v469, 0.5
        %v598 = vmul.f32 %v470, 0.5
        %v599 = vmul.f32 %v471, 0.5
        %v600 = vmul.f32 %v472, 0.5
        %v601 = vmul.f32 %v473, 0.5
        %v602 = vmul.f32 %v474, 0.5
        %v603 = vmul.f32 %v475, 0.5
        %v604 = vmul.f32 %v476, 0.5
        %v605 = vmul.f32 %v477, 0.5
        %v606 = vmul.f32 %v478, 0.5
        %v607 = vmul.f32 %v479, 0.5
        %v608 = vmul.f32 %v480, 0.5
        %v609 = vmul.f32 %v481, 0.5
        %v610 = vmul.f32 %v482, 0.5
        %v611 = vmul.f32 %v483, 0.5
        %v612 = vmul.f32 %v484, 0.5
        %v613 = vmul.f32 %v485, 0.5
        %v614 = vmul.f32 %v486, 0.5
        %v615 = vmul.f32 %v487, 0.5
        %v616 = vmul.f32 %v488, 0.5
        %v617 = vmul.f32 %v489, 0.5
        %v618 = vmul.f32 %v490, 0.5
        %v619 = vmul.f32 %v491, 0.5
        %v620 = vmul.f32 %v492, 0.5
        %v621 = vmul.f32 %v493, 0.5
        %v622 = vmul.f32 %v494, 0.5
        %v623 = vmul.f32 %v495, 0.5
        %v624 = vmul.f32 %v496, 0.5
        %v625 = vmul.f32 %v497, 0.5
        %v626 = vmul.f32 %v498, 0.5
        %v627 = vmul.f32 %v499, 0.5
        %v628 = vmul.f32 %v500, 0.5
        %v629 = vmul.f32 %v501, 0.5
        %v630 = vmul.f32 %v502, 0.5
        %v631 = vmul.f32 %v503, 0.5
        %v632 = vmul.f32 %v504, 0.5
        %v633 = vmul.f32 %v505, 0.5
        %v634 = vmul.f32 %v506, 0.5
        %v635 = vmul.f32 %v507, 0.5
        %v636 = vmul.f32 %v508, 0.5
        %v637 = vmul.f32 %v509, 0.5
        %v638 = vmul.f32 %v510, 0.5
        %v639 = vmul.f32 %v511, 0.5
        %v640 = vmul.f32 %v512, 0.5
        %v641 = vmul.f32 %v513, 0.5
        %v642 = vmul.f32 %v514, 0.5
        %v643 = vmul.f32 %v515, 0.5
        %v644 = vmul.f32 %v516, 0.5
        %v645 = vmul.f32 %v517, 0.5
        %v646 = vmul.f32 %v518, 0.5
        %v647 = vmul.f32 %v519, 0.5
        %v648 = vmul.f32 %v520, 0.5
        %v649 = vmul.f32 %v521, 0.5
        %v650 = vadd.f32 %v522, 0.5
        %v651 = vadd.f32 %v523, 0.5
        %v652 = vadd.f32 %v524, 0.5
        %v653 = vadd.f32 %v525, 0.5
        %v654 = vadd.f32 %v526, 0.5
        %v655 = vadd.f32 %v527, 0.5
        %v656 = vadd.f32 %v528, 0.5
        %v657 = vadd.f32 %v529, 0.5
        %v658 = vadd.f32 %v530, 0.5
        %v659 = vadd.f32 %v531, 0.5
        %v660 = vadd.f32 %v532, 0.5
        %v661 = vadd.f32 %v533, 0.5
        %v662 = vadd.f32 %v534, 0.5
        %v663 = vadd.f32 %v535, 0.5
        %v664 = vadd.f32 %v536, 0.5
        %v665 = vadd.f32 %v537, 0.5
        %v666 = vadd.f32 %v538, 0.5
        %v667 = vadd.f32 %v539, 0.5
        %v668 = vadd.f32 %v540, 0.5
        %v669 = vadd.f32 %v541, 0.5
        %v670 = vadd.f32 %v542, 0.5
        %v671 = vadd.f32 %v543, 0.5
        %v672 = vadd.f32 %v544, 0.5
        %v673 = vadd.f32 %v545, 0.5
        %v674 = vadd.f32 %v546, 0.5
        %v675 = vadd.f32 %v547, 0.5
        %v676 = vadd.f32 %v548, 0.5
        %v677 = vadd.f32 %v549, 0.5
        %v678 = vadd.f32 %v550, 0.5
        %v679 = vadd.f32 %v551, 0.5
        %v680 = vadd.f32 %v552, 0.5
        %v681 = vadd.f32 %v553, 0.5
        %v682 = vadd.f32 %v554, 0.5
        %v683 = vadd.f32 %v555, 0.5
        %v684 = vadd.f32 %v556, 0.5
        %v685 = vadd.f32 %v557, 0.5
        %v686 = vadd.f32 %v558, 0.5
        %v687 = vadd.f32 %v559, 0.5
        %v688 = vadd.f32 %v560, 0.5
        %v689 = vadd.f32 %v561, 0.5
        %v690 = vadd.f32 %v562, 0.5
        %v691 = vadd.f32 %v563, 0.5
        %v692 = vadd.f32 %v564, 0.5
        %v693 = vadd.f32 %v565, 0.5
        %v694 = vadd.f32 %v566, 0.5
        %v695 = vadd.f32 %v567, 0.5
        %v696 = vadd.f32 %v568, 0.5
        %v697 = vadd.f32 %v569, 0.5
        %v698 = vadd.f32 %v570, 0.5
        %v699 = vadd.f32 %v571, 0.5
        %v700 = vadd.f32 %v572, 0.5
        %v701 = vadd.f32 %v573, 0.5
        %v702 = vadd.f32 %v574, 0.5
        %v703 = vadd.f32 %v575, 0.5
        %v704 = vadd.f32 %v576, 0.5
        %v705 = vadd.f32 %v577, 0.5
        %v706 = vadd.f32 %v578, 0.5
        %v707 = vadd.f32 %v579, 0.5
        %v708 = vadd.f32 %v580, 0.5
        %v709 = vadd.f32 %v581, 0.5
        %v710 = vadd.f32 %v582, 0.5
        %v711 = vadd.f32 %v583, 0.5
        %v712 = vadd.f32 %v584, 0.5
        %v713 = vadd.f32 %v585, 0.5
        %v714 = vadd.f32 %v586, 0.5
        %v715 = vadd.f32 %v587, 0.5
        %v716 = vadd.f32 %v588, 0.5
        %v717 = vadd.f32 %v589, 0.5
        %v718 = vadd.f32 %v590, 0.5
        %v719 = vadd.f32 %v591, 0.5
        %v720 = vadd.f32 %v592, 0.5
        %v721 = vadd.f32 %v593, 0.5
        %v722 = vadd.f32 %v594, 0.5
        %v723 = vadd.f32 %v595, 0.5
        %v724 = vadd.f32 %v596, 0.5
        %v725 = vadd.f32 %v597, 0.5
        %v726 = vadd.f32 %v598, 0.5
        %v727 = vadd.f32 %v599, 0.5
        %v728 = vadd.f32 %v600, 0.5
        %v729 = vadd.f32 %v601, 0.5
        %v730 = vadd.f32 %v602, 0.5
        %v731 = vadd.f32 %v603, 0.5
        %v732 = vadd.f32 %v604, 0.5
        %v733 = vadd.f32 %v605, 0.5
        %v734 = vadd.f32 %v606, 0.5
        %v735 = vadd.f32 %v607, 0.5
        %v736 = vadd.f32 %v608, 0.5
        %v737 = vadd.f32 %v609, 0.5
        %v738 = vadd.f32 %v610, 0.5
        %v739 = vadd.f32 %v611, 0.5
        %v740 = vadd.f32 %v612, 0.5
        %v741 = vadd.f32 %v613, 0.5
        %v742 = vadd.f32 %v614, 0.5
        %v743 = vadd.f32 %v615, 0.5
        %v744 = vadd.f32 %v616, 0.5
        %v745 = vadd.f32 %v617, 0.5
        %v746 = vadd.f32 %v618, 0.5
        %v747 = vadd.f32 %v619, 0.5
        %v748 = vadd.f32 %v620, 0.5
        %v749 = vadd.f32 %v621, 0.5
        %v750 = vadd.f32 %v622, 0.5
        %v751 = vadd.f32 %v623, 0.5
        %v752 = vadd.f32 %v624, 0.5
        %v753 = vadd.f32 %v625, 0.5
        %v754 = vadd.f32 %v626, 0.5
        %v755 = vadd.f32 %v627, 0.5
        %v756 = vadd.f32 %v628, 0.5
        %v757 = vadd.f32 %v629, 0.5
        %v758 = vadd.f32 %v630, 0.5
        %v759 = vadd.f32 %v631, 0.5
        %v760 = vadd.f32 %v632, 0.5
        %v761 = vadd.f32 %v633, 0.5
        %v762 = vadd.f32 %v634, 0.5
        %v763 = vadd.f32 %v635, 0.5
        %v764 = vadd.f32 %v636, 0.5
        %v765 = vadd.f32 %v637, 0.5
        %v766 = vadd.f32 %v638, 0.5
        %v767 = vadd.f32 %v639, 0.5
        %v768 = vadd.f32 %v640, 0.5
        %v769 = vadd.f32 %v641, 0.5
        %v770 = vadd.f32 %v642, 0.5
        %v771 = vadd.f32 %v643, 0.5
        %v772 = vadd.f32 %v644, 0.5
        %v773 = vadd.f32 %v645, 0.5
        %v774 = vadd.f32 %v646, 0.5
        %v775 = vadd.f32 %v647, 0.5
        %v776 = vadd.f32 %v648, 0.5
        %v777 = vadd.f32 %v649, 0.5
        %778 = vst [vmem:[%s135] sm:$0xff] %v650
        %779 = vst [vmem:[%s135 + $0x8] sm:$0xff] %v651
        %780 = vst [vmem:[%s135 + $0x10] sm:$0xff] %v652
        %781 = vst [vmem:[%s135 + $0x18] sm:$0xff] %v653
        %782 = vst [vmem:[%s135 + $0x20] sm:$0xff] %v654
        %783 = vst [vmem:[%s135 + $0x28] sm:$0xff] %v655
        %784 = vst [vmem:[%s135 + $0x30] sm:$0xff] %v656
        %785 = vst [vmem:[%s135 + $0x38] sm:$0xff] %v657
        %786 = vst [vmem:[%s135 + $0x40] sm:$0xff] %v658
        %787 = vst [vmem:[%s135 + $0x48] sm:$0xff] %v659
        %788 = vst [vmem:[%s135 + $0x50] sm:$0xff] %v660
        %789 = vst [vmem:[%s135 + $0x58] sm:$0xff] %v661
        %790 = vst [vmem:[%s135 + $0x60] sm:$0xff] %v662
        %791 = vst [vmem:[%s135 + $0x68] sm:$0xff] %v663
        %792 = vst [vmem:[%s135 + $0x70] sm:$0xff] %v664
        %793 = vst [vmem:[%s135 + $0x78] sm:$0xff] %v665
        %794 = vst [vmem:[%s135 + $0x80] sm:$0xff] %v666
        %795 = vst [vmem:[%s135 + $0x88] sm:$0xff] %v667
        %796 = vst [vmem:[%s135 + $0x90] sm:$0xff] %v668
        %797 = vst [vmem:[%s135 + $0x98] sm:$0xff] %v669
        %798 = vst [vmem:[%s135 + $0xa0] sm:$0xff] %v670
        %799 = vst [vmem:[%s135 + $0xa8] sm:$0xff] %v671
        %800 = vst [vmem:[%s135 + $0xb0] sm:$0xff] %v672
        %801 = vst [vmem:[%s135 + $0xb8] sm:$0xff] %v673
        %802 = vst [vmem:[%s135 + $0xc0] sm:$0xff] %v674
        %803 = vst [vmem:[%s135 + $0xc8] sm:$0xff] %v675
        %804 = vst [vmem:[%s135 + $0xd0] sm:$0xff] %v676
        %805 = vst [vmem:[%s135 + $0xd8] sm:$0xff] %v677
        %806 = vst [vmem:[%s135 + $0xe0] sm:$0xff] %v678
        %807 = vst [vmem:[%s135 + $0xe8] sm:$0xff] %v679
        %808 = vst [vmem:[%s135 + $0xf0] sm:$0xff] %v680
        %809 = vst [vmem:[%s135 + $0xf8] sm:$0xff] %v681
        %810 = vst [vmem:[%s135 + $0x100] sm:$0xff] %v682
        %811 = vst [vmem:[%s135 + $0x108] sm:$0xff] %v683
        %812 = vst [vmem:[%s135 + $0x110] sm:$0xff] %v684
        %813 = vst [vmem:[%s135 + $0x118] sm:$0xff] %v685
        %814 = vst [vmem:[%s135 + $0x120] sm:$0xff] %v686
        %815 = vst [vmem:[%s135 + $0x128] sm:$0xff] %v687
        %816 = vst [vmem:[%s135 + $0x130] sm:$0xff] %v688
        %817 = vst [vmem:[%s135 + $0x138] sm:$0xff] %v689
        %818 = vst [vmem:[%s135 + $0x140] sm:$0xff] %v690
        %819 = vst [vmem:[%s135 + $0x148] sm:$0xff] %v691
        %820 = vst [vmem:[%s135 + $0x150] sm:$0xff] %v692
        %821 = vst [vmem:[%s135 + $0x158] sm:$0xff] %v693
        %822 = vst [vmem:[%s135 + $0x160] sm:$0xff] %v694
        %823 = vst [vmem:[%s135 + $0x168] sm:$0xff] %v695
        %824 = vst [vmem:[%s135 + $0x170] sm:$0xff] %v696
        %825 = vst [vmem:[%s135 + $0x178] sm:$0xff] %v697
        %826 = vst [vmem:[%s135 + $0x180] sm:$0xff] %v698
        %827 = vst [vmem:[%s135 + $0x188] sm:$0xff] %v699
        %828 = vst [vmem:[%s135 + $0x190] sm:$0xff] %v700
        %829 = vst [vmem:[%s135 + $0x198] sm:$0xff] %v701
        %830 = vst [vmem:[%s135 + $0x1a0] sm:$0xff] %v702
        %831 = vst [vmem:[%s135 + $0x1a8] sm:$0xff] %v703
        %832 = vst [vmem:[%s135 + $0x1b0] sm:$0xff] %v704
        %833 = vst [vmem:[%s135 + $0x1b8] sm:$0xff] %v705
        %834 = vst [vmem:[%s135 + $0x1c0] sm:$0xff] %v706
        %835 = vst [vmem:[%s135 + $0x1c8] sm:$0xff] %v707
        %836 = vst [vmem:[%s135 + $0x1d0] sm:$0xff] %v708
        %837 = vst [vmem:[%s135 + $0x1d8] sm:$0xff] %v709
        %838 = vst [vmem:[%s135 + $0x1e0] sm:$0xff] %v710
        %839 = vst [vmem:[%s135 + $0x1e8] sm:$0xff] %v711
        %840 = vst [vmem:[%s135 + $0x1f0] sm:$0xff] %v712
        %841 = vst [vmem:[%s135 + $0x1f8] sm:$0xff] %v713
        %842 = vst [vmem:[%s135 + $0x200] sm:$0xff] %v714
        %843 = vst [vmem:[%s135 + $0x208] sm:$0xff] %v715
        %844 = vst [vmem:[%s135 + $0x210] sm:$0xff] %v716
        %845 = vst [vmem:[%s135 + $0x218] sm:$0xff] %v717
        %846 = vst [vmem:[%s135 + $0x220] sm:$0xff] %v718
        %847 = vst [vmem:[%s135 + $0x228] sm:$0xff] %v719
        %848 = vst [vmem:[%s135 + $0x230] sm:$0xff] %v720
        %849 = vst [vmem:[%s135 + $0x238] sm:$0xff] %v721
        %850 = vst [vmem:[%s135 + $0x240] sm:$0xff] %v722
        %851 = vst [vmem:[%s135 + $0x248] sm:$0xff] %v723
        %852 = vst [vmem:[%s135 + $0x250] sm:$0xff] %v724
        %853 = vst [vmem:[%s135 + $0x258] sm:$0xff] %v725
        %854 = vst [vmem:[%s135 + $0x260] sm:$0xff] %v726
        %855 = vst [vmem:[%s135 + $0x268] sm:$0xff] %v727
        %856 = vst [vmem:[%s135 + $0x270] sm:$0xff] %v728
        %857 = vst [vmem:[%s135 + $0x278] sm:$0xff] %v729
        %858 = vst [vmem:[%s135 + $0x280] sm:$0xff] %v730
        %859 = vst [vmem:[%s135 + $0x288] sm:$0xff] %v731
        %860 = vst [vmem:[%s135 + $0x290] sm:$0xff] %v732
        %861 = vst [vmem:[%s135 + $0x298] sm:$0xff] %v733
        %862 = vst [vmem:[%s135 + $0x2a0] sm:$0xff] %v734
        %863 = vst [vmem:[%s135 + $0x2a8] sm:$0xff] %v735
        %864 = vst [vmem:[%s135 + $0x2b0] sm:$0xff] %v736
        %865 = vst [vmem:[%s135 + $0x2b8] sm:$0xff] %v737
        %866 = vst [vmem:[%s135 + $0x2c0] sm:$0xff] %v738
        %867 = vst [vmem:[%s135 + $0x2c8] sm:$0xff] %v739
        %868 = vst [vmem:[%s135 + $0x2d0] sm:$0xff] %v740
        %869 = vst [vmem:[%s135 + $0x2d8] sm:$0xff] %v741
        %870 = vst [vmem:[%s135 + $0x2e0] sm:$0xff] %v742
        %871 = vst [vmem:[%s135 + $0x2e8] sm:$0xff] %v743
        %872 = vst [vmem:[%s135 + $0x2f0] sm:$0xff] %v744
        %873 = vst [vmem:[%s135 + $0x2f8] sm:$0xff] %v745
        %874 = vst [vmem:[%s135 + $0x300] sm:$0xff] %v746
        %875 = vst [vmem:[%s135 + $0x308] sm:$0xff] %v747
        %876 = vst [vmem:[%s135 + $0x310] sm:$0xff] %v748
        %877 = vst [vmem:[%s135 + $0x318] sm:$0xff] %v749
        %878 = vst [vmem:[%s135 + $0x320] sm:$0xff] %v750
        %879 = vst [vmem:[%s135 + $0x328] sm:$0xff] %v751
        %880 = vst [vmem:[%s135 + $0x330] sm:$0xff] %v752
        %881 = vst [vmem:[%s135 + $0x338] sm:$0xff] %v753
        %882 = vst [vmem:[%s135 + $0x340] sm:$0xff] %v754
        %883 = vst [vmem:[%s135 + $0x348] sm:$0xff] %v755
        %884 = vst [vmem:[%s135 + $0x350] sm:$0xff] %v756
        %885 = vst [vmem:[%s135 + $0x358] sm:$0xff] %v757
        %886 = vst [vmem:[%s135 + $0x360] sm:$0xff] %v758
        %887 = vst [vmem:[%s135 + $0x368] sm:$0xff] %v759
        %888 = vst [vmem:[%s135 + $0x370] sm:$0xff] %v760
        %889 = vst [vmem:[%s135 + $0x378] sm:$0xff] %v761
        %890 = vst [vmem:[%s135 + $0x380] sm:$0xff] %v762
        %891 = vst [vmem:[%s135 + $0x388] sm:$0xff] %v763
        %892 = vst [vmem:[%s135 + $0x390] sm:$0xff] %v764
        %893 = vst [vmem:[%s135 + $0x398] sm:$0xff] %v765
        %894 = vst [vmem:[%s135 + $0x3a0] sm:$0xff] %v766
        %895 = vst [vmem:[%s135 + $0x3a8] sm:$0xff] %v767
        %896 = vst [vmem:[%s135 + $0x3b0] sm:$0xff] %v768
        %897 = vst [vmem:[%s135 + $0x3b8] sm:$0xff] %v769
        %898 = vst [vmem:[%s135 + $0x3c0] sm:$0xff] %v770
        %899 = vst [vmem:[%s135 + $0x3c8] sm:$0xff] %v771
        %900 = vst [vmem:[%s135 + $0x3d0] sm:$0xff] %v772
        %901 = vst [vmem:[%s135 + $0x3d8] sm:$0xff] %v773
        %902 = vst [vmem:[%s135 + $0x3e0] sm:$0xff] %v774
        %903 = vst [vmem:[%s135 + $0x3e8] sm:$0xff] %v775
        %904 = vst [vmem:[%s135 + $0x3f0] sm:$0xff] %v776
        %905 = vst [vmem:[%s135 + $0x3f8] sm:$0xff] %v777
        %s906 = sand.u32 %s52, 1
        %s907 = scalar_lea.sflag [#allocation4], %s906
        %s908 = sand.u32 %s52, 1
        %s909 = smul.addr %s908, 1024
        %s910 = scalar_lea.vmem [#allocation5], %s909
        // Predicated region
        $region29: #{tpu_custom_call.1} parent=23 // pred_check
          %p911 = pneg %p62
        $region30: #{tpu_custom_call.1} parent=23 // pred_check_branch
          %913 = sbr.rel (%p911) target = $region32
        $region31: #{tpu_custom_call.1} parent=23 // pred_region
          %s914 = smul.u32 16, %s18
          %s916 = ssub.s32 16384, 16384
          %917 = vsyncadd %s907, %s916
          %s918 = smul.addr %s914, 8
          %s919 = smul.addr %s918, 128
          %s920 = scalar_lea.hbm %s1, %s919
          %s921 = sshll.u32 %s910, 4
          %s922 = int_to_ptr.vmem [resolvable:$true] %s921
          %927 = dma.vmem_to_hbm [thread:$0]  %s922, 16384, %s920, %s907, 1024, 1024, 64
        $region32: #{tpu_custom_call.1} parent=23 // pred_fallthru
          _
      $region24: #{tpu_custom_call.1} parent=5 // pred_fallthru
        _
      %p928 = scmp.le.s32.totalorder 2, %s13
      // Predicated region
      $region33: #{tpu_custom_call.1} parent=5 // pred_check
        %p929 = pneg %p928
      $region34: #{tpu_custom_call.1} parent=5 // pred_check_branch
        %931 = sbr.rel (%p929) target = $region36
      $region35: #{tpu_custom_call.1} parent=5 // pred_region
        %s932 = ssub.s32 %s13, 2
        // Predicated region
        $region37: #{tpu_custom_call.1} parent=35 // pred_check
          %p933 = pneg %p68
        $region38: #{tpu_custom_call.1} parent=35 // pred_check_branch
          %935 = sbr.rel (%p933) target = $region40
        $region39: #{tpu_custom_call.1} parent=35 // pred_region
          %s936 = sand.u32 %s53, 1
          %s937 = scalar_lea.sflag [#allocation4], %s936
          %s938 = sand.u32 %s53, 1
          %s939 = smul.addr %s938, 1024
          %s940 = scalar_lea.vmem [#allocation5], %s939
          %941 = dma.done %s937, 16384
        $region40: #{tpu_custom_call.1} parent=35 // pred_fallthru
          _
      $region36: #{tpu_custom_call.1} parent=5 // pred_fallthru
        _
    $region6: #{tpu_custom_call.1} parent=1 // loop_footer
      %s17 = sadd.s32 1, %s13
    $region7: #{tpu_custom_call.1} parent=1 // loop_footer_branch
      %12 = sbr.rel target = $region3
    $region8: #{tpu_custom_call.1} parent=1 // loop_exit
      _
    %942 = vsyncpa [#allocation3], 1
    %s943 = scalar_lea.sflag [#allocation3], 1
    %944 = vsyncpa %s943, 1
    %945 = vsyncpa [#allocation4], 1
    %s946 = scalar_lea.sflag [#allocation4], 1
    %947 = vsyncpa %s946, 1

</llo_original>
